<compile_context>
chip_gen: v7x
topology: tpu7x:2x2x1
jax: 0.10.0
libtpu: 0.0.40
codegen_flags: <defaults>
</compile_context>

<pallas_src>
import functools

import jax
import jax.numpy as jnp
import numpy as np
from jax.experimental import pallas as pl
from jax.experimental.pallas import tpu as pltpu


def _round_up(x, m):
    return ((x + m - 1) // m) * m


def _pick_block_c(C, V, W, L, itemsize):
    """Largest divisor of C whose lane-padded VMEM blocks stay ~few MiB."""
    lane = 128
    # double-buffered, lane-padded input + output block + matmul temps, per channel
    bytes_per_c = (2 * itemsize * (V * max(L, lane) + W * max(L, lane))
                   + 4 * (V + W) * lane)
    cap = max(1, (6 * 1024 * 1024) // bytes_per_c)
    tc = 1
    for d in range(1, C + 1):
        if C % d == 0 and d <= cap:
            tc = d
    return tc


def _nconv_kernel(x_ref, a_ref, o_ref, *scratch, L, Lp, lane_dense_out):
    """One (batch, C-tile) block per grid step.

    x_ref: (1, TC, V, L)           input features, native NCVL layout
    a_ref: (V, W)                  support / adjacency matrix
    o_ref: (1, TC, W, L) default   exact module layout
           (1, TC, L, W)           if lane_dense_out (W on lanes)
    scratch: optional (TC, Lp, V) staging buffer, present only when L % 8 != 0
    """
    _, TC, V, _ = x_ref.shape
    W = a_ref.shape[1]

    # (TC, V, L) -> (TC, L, V): minor-dim swap on the XLU.
    # NOTE: if the producer can emit (N, C, L, V) (lane-dense V), this swap and
    # the 128/L lane padding of the input block go away entirely.
    xt = jnp.swapaxes(x_ref[0], 1, 2)

    if Lp == L:
        xp = xt                                   # already sublane-aligned
    else:
        # Pad L (an M-dim of the matmul) to a multiple of 8 sublanes via a tiny
        # VMEM staging store; pad rows are don't-care (dropped below).
        xpad_ref = scratch[0]
        xpad_ref[:, :L, :] = xt
        xp = xpad_ref[...]                        # (TC, Lp, V)

    # One wide MXU matmul: M = TC*Lp, K = V, N = W.  f32 accumulation.
    y = jnp.dot(xp.reshape(TC * Lp, V), a_ref[...],
                preferred_element_type=jnp.float32)
    y = y.reshape(TC, Lp, W)
    if Lp != L:
        y = y[:, :L, :]                           # drop pad rows

    if lane_dense_out:
        # Lane-dense store: W (~V, >=128 for real graphs) on lanes, no relayout,
        # no masked vst.msk.
        o_ref[0] = y.astype(o_ref.dtype)                       # (TC, L, W)
    else:
        # Exact module layout: swap minor dims back on the XLU, store (W, L).
        o_ref[0] = jnp.swapaxes(y, 1, 2).astype(o_ref.dtype)   # (TC, W, L)


def nconv(x, a, *, block_c=None, lane_dense_out=False):
    """Pallas TPU implementation of torch.einsum('ncvl,vw->ncwl', x, A).

    x: (N, C, V, L), a: (V, W).
    Returns (N, C, W, L) by default (exact module semantics).  With
    lane_dense_out=True returns (N, C, L, W) (W on lanes) for fused consumers,
    skipping the swap-back relayout and the masked sub-128-lane stores.
    Pass bf16 x / a for the HBM-roofline win on v6e/v7x (acc stays f32).
    """
    N, C, V, L = x.shape
    V2, W = a.shape
    assert V2 == V, f"A first dim {V2} must match node dim {V}"

    Lp = _round_up(L, 8)
    itemsize = jnp.dtype(x.dtype).itemsize

    if block_c is None:
        tc = _pick_block_c(C, V, W, L, itemsize)
    else:
        tc = max(1, min(block_c, C))
        while C % tc != 0:
            tc -= 1

    scratch_shapes = []
    if Lp != L:
        scratch_shapes.append(pltpu.VMEM((tc, Lp, V), x.dtype))

    if lane_dense_out:
        out_shape = jax.ShapeDtypeStruct((N, C, L, W), x.dtype)
        out_spec = pl.BlockSpec((1, tc, L, W), lambda n, c: (n, c, 0, 0))
    else:
        out_shape = jax.ShapeDtypeStruct((N, C, W, L), x.dtype)
        out_spec = pl.BlockSpec((1, tc, W, L), lambda n, c: (n, c, 0, 0))

    kernel = functools.partial(_nconv_kernel, L=L, Lp=Lp,
                               lane_dense_out=lane_dense_out)

    return pl.pallas_call(
        kernel,
        out_shape=out_shape,
        grid_spec=pltpu.PrefetchScalarGridSpec(
            num_scalar_prefetch=0,
            grid=(N, C // tc),
            in_specs=[
                pl.BlockSpec((1, tc, V, L), lambda n, c: (n, c, 0, 0)),
                pl.BlockSpec((V, W), lambda n, c: (0, 0)),
            ],
            out_specs=out_spec,
            scratch_shapes=scratch_shapes,
        ),
        compiler_params=pltpu.CompilerParams(
            dimension_semantics=("parallel", "parallel"),
            vmem_limit_bytes=32 * 1024 * 1024,
        ),
    )(x, a)


def _reference(x, a):
    """Pure-JAX replica of the PyTorch forward."""
    return jnp.einsum("ncvl,vw->ncwl", x, a)


if __name__ == "__main__":
    key = jax.random.PRNGKey(0)
    kx, ka, kx2 = jax.random.split(key, 3)

    # Small shapes consistent with the module: batch N=2, channels C=4,
    # nodes V=16 (spatial), seq L=8.
    N, C, V, L = 2, 4, 16, 8
    x = jax.random.normal(kx, (N, C, V, L), dtype=jnp.float32)
    # Row-normalized random adjacency-like support.
    a = jax.random.uniform(ka, (V, V), dtype=jnp.float32)
    a = a / jnp.sum(a, axis=1, keepdims=True)

    # 1) Default path: exact (N, C, W, L) module layout.
    out = jax.block_until_ready(nconv(x, a))
    ref = _reference(x, a)
    np.testing.assert_allclose(np.asarray(out), np.asarray(ref),
                               rtol=1e-5, atol=1e-5)

    # 2) Lane-dense output path: same numbers, (N, C, L, W) layout.
    out_ld = jax.block_until_ready(nconv(x, a, lane_dense_out=True))
    np.testing.assert_allclose(np.asarray(out_ld),
                               np.asarray(jnp.swapaxes(ref, 2, 3)),
                               rtol=1e-5, atol=1e-5)

    # 3) Non-sublane-aligned L (like production L=12/13): exercises the
    #    in-kernel pad path that replaced the slow per-channel fallback.
    L2 = 12
    x2 = jax.random.normal(kx2, (N, C, V, L2), dtype=jnp.float32)
    out2 = jax.block_until_ready(nconv(x2, a))
    ref2 = _reference(x2, a)
    np.testing.assert_allclose(np.asarray(out2), np.asarray(ref2),
                               rtol=1e-5, atol=1e-5)

    print("KERNEL_OK")
</pallas_src>

<mosaic_0001>
module attributes {stable_mosaic.version = 11 : i64} {
  func.func @_nconv_kernel(%arg0: i32, %arg1: i32, %arg2: memref<1x4x16x8xf32, #tpu.memory_space<vmem>>, %arg3: memref<16x16xf32, #tpu.memory_space<vmem>>, %arg4: memref<1x4x16x8xf32, #tpu.memory_space<vmem>>) attributes {dimension_semantics = [#tpu.dimension_semantics<parallel>, #tpu.dimension_semantics<parallel>], iteration_bounds = array<i64: 2, 1>, scalar_prefetch = 0 : i64, scratch_operands = 0 : i64, tpu.core_type = #tpu.core_type<tc>, window_params = [{transform_indices = @transform_0, window_bounds = array<i64: 1, 4, 16, 8>}, {pipeline_mode = #tpu.pipeline_mode<synchronous>, transform_indices = @transform_1, window_bounds = array<i64: 16, 16>}, {transform_indices = @transform_2, window_bounds = array<i64: 1, 4, 16, 8>}]} {
    %c0 = arith.constant 0 : index
    %c0_0 = arith.constant 0 : index
    %c0_1 = arith.constant 0 : index
    %c0_2 = arith.constant 0 : index
    %0 = vector.load %arg2[%c0, %c0_0, %c0_1, %c0_2] : memref<1x4x16x8xf32, #tpu.memory_space<vmem>>, vector<1x4x16x8xf32>
    %1 = vector.shape_cast %0 : vector<1x4x16x8xf32> to vector<4x16x8xf32>
    %2 = tpu.transpose %1, [0, 2, 1] : vector<4x16x8xf32> -> vector<4x8x16xf32>
    %3 = vector.shape_cast %2 : vector<4x8x16xf32> to vector<32x16xf32>
    %c0_3 = arith.constant 0 : index
    %c0_4 = arith.constant 0 : index
    %4 = vector.load %arg3[%c0_3, %c0_4] : memref<16x16xf32, #tpu.memory_space<vmem>>, vector<16x16xf32>
    %cst = arith.constant dense<0.000000e+00> : vector<32x16xf32>
    %5 = tpu.matmul %3, %4, %cst {dimension_numbers = #tpu.dot_dimension_numbers<[1], [0], [0], [1], [0, 0, 1, 1], [], []>} : vector<32x16xf32>, vector<16x16xf32>, vector<32x16xf32> -> vector<32x16xf32>
    %6 = vector.shape_cast %5 : vector<32x16xf32> to vector<4x8x16xf32>
    %7 = tpu.transpose %6, [0, 2, 1] : vector<4x8x16xf32> -> vector<4x16x8xf32>
    %c0_5 = arith.constant 0 : index
    %c0_6 = arith.constant 0 : index
    %c0_7 = arith.constant 0 : index
    %c0_8 = arith.constant 0 : index
    %8 = vector.load %arg4[%c0_5, %c0_6, %c0_7, %c0_8] : memref<1x4x16x8xf32, #tpu.memory_space<vmem>>, vector<1x4x16x8xf32>
    %9 = vector.shape_cast %8 : vector<1x4x16x8xf32> to vector<4x16x8xf32>
    %10 = vector.shape_cast %7 : vector<4x16x8xf32> to vector<1x4x16x8xf32>
    tpu.vector_store %arg4[%c0_5, %c0_6, %c0_7, %c0_8], %10 {strides = array<i32>} : memref<1x4x16x8xf32, #tpu.memory_space<vmem>>, vector<1x4x16x8xf32>,
    return
  }
  func.func @transform_0(%arg0: i32, %arg1: i32) -> (i32, i32, i32, i32) {
    %c0_i32 = arith.constant 0 : i32
    %c0_i32_0 = arith.constant 0 : i32
    %c0_i32_1 = arith.constant 0 : i32
    return %arg0, %arg1, %c0_i32, %c0_i32_0 : i32, i32, i32, i32
  }
  func.func @transform_1(%arg0: i32, %arg1: i32) -> (i32, i32) {
    %c0_i32 = arith.constant 0 : i32
    %c0_i32_0 = arith.constant 0 : i32
    %c0_i32_1 = arith.constant 0 : i32
    return %c0_i32, %c0_i32_0 : i32, i32
  }
  func.func @transform_2(%arg0: i32, %arg1: i32) -> (i32, i32, i32, i32) {
    %c0_i32 = arith.constant 0 : i32
    %c0_i32_0 = arith.constant 0 : i32
    %c0_i32_1 = arith.constant 0 : i32
    return %arg0, %arg1, %c0_i32, %c0_i32_0 : i32, i32, i32, i32
  }
}

</mosaic_0001>

<llo_original>
// kernel: tpu_custom_call.1
$region0: #{tpu_custom_call.1}
  #allocation0 [shape = 'u32[]', space=smem, size = 0x4, offset = 0x4, fixed_abs, tag = 'smem constant byte address 0x4 - core index']
  #allocation1 [shape = 'u32[144,128]{1,0:T(1,128)}', space=vmem, size = 0x12000, scoped, tag = 'internal scratch']
  %s0 = inlined_call_operand.vmem [shape: f32[2,4,16,8], index: 0, kind: input, shape index: {}]
  %s1 = inlined_call_operand.vmem [shape: f32[16,16], index: 1, kind: input, shape index: {}]
  %s2 = inlined_call_operand.vmem [shape: f32[2,4,16,8], index: 2, kind: output, shape index: {}]
  %s3 = sld [smem:[#allocation0]]
  $region41: #{tpu_custom_call.1} parent=0
    _
  %s5 = ssub.s32 1, %s3
  %s6 = scalar_select 0, %s5, %s3
  loop: start=0, step=1, limit=4
  $region2: #{tpu_custom_call.1} parent=0 // loop_pre_header
    _
  $region3: #{tpu_custom_call.1} parent=0 // loop_header
    %s8 = sphi 0, %s12
    %p9 = scmp.ge.s32.totalorder %s8, 4
    %s15 = sphi 0, %s27
    %s16 = sphi 0, %s23
    %s17 = sphi 0, %s15
    %s18 = sphi 0, %s16
    %s19 = sphi 0, %s17
    %s20 = sphi 0, %s18
    %s32 = sphi 0, %s34
    %s35 = sphi 0, %s32
    %s36 = sphi 0, %s35
    %s52 = sphi 0, %s36
    %s56 = sphi 0, %s56
    %s58 = sphi 0, %s56
    %s59 = sphi 0, %s58
    %s73 = sphi 0, %s59
    %s81 = sphi 0, %s83
    %s84 = sphi 0, %s81
    %s85 = sphi 0, %s84
    %s101 = sphi 0, %s85
  $region4: #{tpu_custom_call.1} parent=0 // loop_header_branch
    %11 = sbr.rel (%p9) target = $region8
  $region5: #{tpu_custom_call.1} parent=0 // loop_body
    %s13 = ssub.s32 %s8, 1
    %s14 = ssub.s32 %s8, 2
    %s21 = sadd.s32 1, %s16
    %p22 = scmp.ge.s32.totalorder %s21, 1
    %s23 = scalar_select %p22, 0, %s21
    %s24 = sadd.s32 1, %s15
    %s25 = scalar_select %p22, %s24, %s15
    %p26 = scmp.ge.s32.totalorder %s25, 2
    %s27 = scalar_select %p26, 0, %s25
    %s28 = ssub.s32 %s15, %s27
    %s29 = ssub.s32 %s16, %s23
    %s30 = sor.u32 %s28, %s29
    %p31 = scmp.eq.s32.totalorder %s30, 0
    %s33 = sadd.s32 %s32, 1
    %s34 = scalar_select %p31, %s32, %s33
    %p37 = pneg %p31
    %p38 = scmp.eq.s32.totalorder %s8, 1
    %p39 = por %p37, %p38
    %p40 = scmp.ne.s32.totalorder %s32, %s35
    %p41 = scmp.eq.s32.totalorder %s8, 0
    %p42 = por %p40, %p41
    %p43 = scmp.ne.s32.totalorder %s32, %s35
    %p44 = scmp.eq.s32.totalorder %s13, 1
    %p45 = por %p43, %p44
    %p46 = scmp.ne.s32.totalorder %s35, %s36
    %p47 = scmp.eq.s32.totalorder %s13, 0
    %p48 = por %p46, %p47
    %p49 = scmp.ne.s32.totalorder %s35, %s36
    %p50 = scmp.eq.s32.totalorder %s14, 1
    %p51 = por %p49, %p50
    %p53 = scmp.ne.s32.totalorder %s36, %s52
    %p54 = scmp.eq.s32.totalorder %s14, 0
    %p55 = por %p53, %p54
    %s57 = sadd.s32 %s56, 1
    %p60 = scmp.eq.s32.totalorder %s8, 1
    %p61 = scmp.ne.s32.totalorder %s56, %s58
    %p62 = scmp.eq.s32.totalorder %s8, 0
    %p63 = por %p61, %p62
    %p64 = scmp.ne.s32.totalorder %s56, %s58
    %p65 = scmp.eq.s32.totalorder %s13, 1
    %p66 = por %p64, %p65
    %p67 = scmp.ne.s32.totalorder %s58, %s59
    %p68 = scmp.eq.s32.totalorder %s13, 0
    %p69 = por %p67, %p68
    %p70 = scmp.ne.s32.totalorder %s58, %s59
    %p71 = scmp.eq.s32.totalorder %s14, 1
    %p72 = por %p70, %p71
    %p74 = scmp.ne.s32.totalorder %s59, %s73
    %p75 = scmp.eq.s32.totalorder %s14, 0
    %p76 = por %p74, %p75
    %s77 = ssub.s32 %s15, %s27
    %s78 = ssub.s32 %s16, %s23
    %s79 = sor.u32 %s77, %s78
    %p80 = scmp.eq.s32.totalorder %s79, 0
    %s82 = sadd.s32 %s81, 1
    %s83 = scalar_select %p80, %s81, %s82
    %p86 = pneg %p80
    %p87 = scmp.eq.s32.totalorder %s8, 1
    %p88 = por %p86, %p87
    %p89 = scmp.ne.s32.totalorder %s81, %s84
    %p90 = scmp.eq.s32.totalorder %s8, 0
    %p91 = por %p89, %p90
    %p92 = scmp.ne.s32.totalorder %s81, %s84
    %p93 = scmp.eq.s32.totalorder %s13, 1
    %p94 = por %p92, %p93
    %p95 = scmp.ne.s32.totalorder %s84, %s85
    %p96 = scmp.eq.s32.totalorder %s13, 0
    %p97 = por %p95, %p96
    %p98 = scmp.ne.s32.totalorder %s84, %s85
    %p99 = scmp.eq.s32.totalorder %s14, 1
    %p100 = por %p98, %p99
    %p102 = scmp.ne.s32.totalorder %s85, %s101
    %p103 = scmp.eq.s32.totalorder %s14, 0
    %p104 = por %p102, %p103
    %p105 = scmp.le.s32.totalorder 1, %s8
    %p106 = scmp.lt.s32.totalorder %s8, 3
    %p107 = pnand %p105, %p106
    %p108 = pneg %p107
    // Predicated region
    $region9: #{tpu_custom_call.1} parent=5 // pred_check
      _
    $region10: #{tpu_custom_call.1} parent=5 // pred_check_branch
      %110 = sbr.rel (%p107) target = $region12
    $region11: #{tpu_custom_call.1} parent=5 // pred_region
      %s111 = ssub.s32 %s8, 1
      // Predicated region
      $region13: #{tpu_custom_call.1} parent=11 // pred_check
        %p112 = pneg %p69
      $region14: #{tpu_custom_call.1} parent=11 // pred_check_branch
        %114 = sbr.rel (%p112) target = $region16
      $region15: #{tpu_custom_call.1} parent=11 // pred_region
        _
      $region16: #{tpu_custom_call.1} parent=11 // pred_fallthru
        _
    $region12: #{tpu_custom_call.1} parent=5 // pred_fallthru
      _
    %p115 = scmp.lt.s32.totalorder %s8, 2
    // Predicated region
    $region17: #{tpu_custom_call.1} parent=5 // pred_check
      %p116 = pneg %p115
    $region18: #{tpu_custom_call.1} parent=5 // pred_check_branch
      %118 = sbr.rel (%p116) target = $region20
    $region19: #{tpu_custom_call.1} parent=5 // pred_region
      // Predicated region
      $region21: #{tpu_custom_call.1} parent=19 // pred_check
        %p119 = pneg %p42
      $region22: #{tpu_custom_call.1} parent=19 // pred_check_branch
        %121 = sbr.rel (%p119) target = $region24
      $region23: #{tpu_custom_call.1} parent=19 // pred_region
        %s122 = smul.u32 4, %s16
        %p123 = scmp.lt.s32.totalorder %s15, 1
        %s124 = scalar_select %p123, %s15, 1
        %p125 = scmp.lt.s32.totalorder %s122, 3
        %s126 = scalar_select %p125, %s122, 3
        %s127 = smul.addr %s126, 2
        %s128 = smul.addr %s124, 8
        %s129 = sadd.s32 %s127, %s128
        %s130 = smul.addr %s129, 8
        %s131 = scalar_lea.vmem %s0, %s130
        %s132 = smul.u32 4, %s16
      $region24: #{tpu_custom_call.1} parent=19 // pred_fallthru
        _
    $region20: #{tpu_custom_call.1} parent=5 // pred_fallthru
      _
    %p133 = scmp.le.s32.totalorder 1, %s8
    %p134 = scmp.lt.s32.totalorder %s8, 3
    %p135 = pnand %p133, %p134
    %p136 = pneg %p135
    // Predicated region
    $region25: #{tpu_custom_call.1} parent=5 // pred_check
      _
    $region26: #{tpu_custom_call.1} parent=5 // pred_check_branch
      %138 = sbr.rel (%p135) target = $region28
    $region27: #{tpu_custom_call.1} parent=5 // pred_region
      %s139 = ssub.s32 %s8, 1
      %s140 = smul.u32 4, %s18
      %p141 = scmp.lt.s32.totalorder %s17, 1
      %s142 = scalar_select %p141, %s17, 1
      %p143 = scmp.lt.s32.totalorder %s140, 3
      %s144 = scalar_select %p143, %s140, 3
      %s145 = smul.addr %s144, 2
      %s146 = smul.addr %s142, 8
      %s147 = sadd.s32 %s145, %s146
      %s148 = smul.addr %s147, 8
      %s149 = scalar_lea.vmem %s0, %s148
      %p150 = pneg %p48
      %p151 = pneg %p45
      %p152 = pneg %p69
      %p153 = pneg %p66
      %p154 = pneg %p97
      %p155 = pneg %p94
      %s156 = smul.u32 4, %s18
      %p157 = scmp.lt.s32.totalorder %s17, 1
      %s158 = scalar_select %p157, %s17, 1
      %p159 = scmp.lt.s32.totalorder %s156, 3
      %s160 = scalar_select %p159, %s156, 3
      %s161 = smul.addr %s160, 2
      %s162 = smul.addr %s158, 8
      %s163 = sadd.s32 %s161, %s162
      %s164 = smul.addr %s163, 8
      %s165 = scalar_lea.vmem %s2, %s164
      %s166 = smul.u32 4, %s18
      %p167 = scmp.lt.s32.totalorder %s17, 1
      %s168 = scalar_select %p167, %s17, 1
      %p169 = scmp.lt.s32.totalorder %s166, 3
      %s170 = scalar_select %p169, %s166, 3
      %s171 = smul.addr %s170, 2
      %s172 = smul.addr %s168, 8
      %s173 = sadd.s32 %s171, %s172
      %s174 = smul.addr %s173, 8
      %s175 = scalar_lea.vmem %s0, %s174
      %s176 = smul.u32 4, %s18
      %s177 = smul.u32 4, %s18
      %p178 = scmp.lt.s32.totalorder %s17, 1
      %s179 = scalar_select %p178, %s17, 1
      %p180 = scmp.lt.s32.totalorder %s177, 3
      %s181 = scalar_select %p180, %s177, 3
      %s182 = smul.addr %s181, 2
      %s183 = smul.addr %s179, 8
      %s184 = sadd.s32 %s182, %s183
      %s185 = smul.addr %s184, 8
      %s186 = scalar_lea.vmem %s2, %s185
      %s187 = smul.u32 4, %s18
      %v188 = vld [vmem:[%s175] sm:$0xff]
      %v189 = vld [vmem:[%s175 + $0x8] sm:$0xff]
      %v190 = vld [vmem:[%s175 + $0x10] sm:$0xff]
      %v191 = vld [vmem:[%s175 + $0x18] sm:$0xff]
      %v192 = vld [vmem:[%s175 + $0x20] sm:$0xff]
      %v193 = vld [vmem:[%s175 + $0x28] sm:$0xff]
      %v194 = vld [vmem:[%s175 + $0x30] sm:$0xff]
      %v195 = vld [vmem:[%s175 + $0x38] sm:$0xff]
      %196 = vxpose.xlu0.b32.start [1/16] %v188, 128
      %197 = vxpose.xlu0.b32.cont [2/16] %v189, 128
      %198 = vxpose.xlu0.b32.cont [3/16] 0.0, 128
      %199 = vxpose.xlu0.b32.cont [4/16] 0.0, 128
      %200 = vxpose.xlu0.b32.cont [5/16] 0.0, 128
      %201 = vxpose.xlu0.b32.cont [6/16] 0.0, 128
      %202 = vxpose.xlu0.b32.cont [7/16] 0.0, 128
      %203 = vxpose.xlu0.b32.cont [8/16] 0.0, 128
      %204 = vxpose.xlu0.b32.cont [9/16] 0.0, 128
      %205 = vxpose.xlu0.b32.cont [10/16] 0.0, 128
      %206 = vxpose.xlu0.b32.cont [11/16] 0.0, 128
      %207 = vxpose.xlu0.b32.cont [12/16] 0.0, 128
      %208 = vxpose.xlu0.b32.cont [13/16] 0.0, 128
      %209 = vxpose.xlu0.b32.cont [14/16] 0.0, 128
      %210 = vxpose.xlu0.b32.cont [15/16] 0.0, 128
      %211 = vxpose.xlu0.b32.end [16/16] 0.0, 128
      %v212 = vpop.trf.xlu0
      %v213 = vpop.trf.xlu0
      %v214 = vpop.trf.xlu0
      %v215 = vpop.trf.xlu0
      %v216 = vpop.trf.xlu0
      %v217 = vpop.trf.xlu0
      %v218 = vpop.trf.xlu0
      %v219 = vpop.trf.xlu0
      %v220 = vpop.trf.xlu0
      %v221 = vpop.trf.xlu0
      %v222 = vpop.trf.xlu0
      %v223 = vpop.trf.xlu0
      %v224 = vpop.trf.xlu0
      %v225 = vpop.trf.xlu0
      %v226 = vpop.trf.xlu0
      %v227 = vpop.trf.xlu0
      %228 = vxpose.xlu0.b32.start [1/16] %v190, 128
      %229 = vxpose.xlu0.b32.cont [2/16] %v191, 128
      %230 = vxpose.xlu0.b32.cont [3/16] 0.0, 128
      %231 = vxpose.xlu0.b32.cont [4/16] 0.0, 128
      %232 = vxpose.xlu0.b32.cont [5/16] 0.0, 128
      %233 = vxpose.xlu0.b32.cont [6/16] 0.0, 128
      %234 = vxpose.xlu0.b32.cont [7/16] 0.0, 128
      %235 = vxpose.xlu0.b32.cont [8/16] 0.0, 128
      %236 = vxpose.xlu0.b32.cont [9/16] 0.0, 128
      %237 = vxpose.xlu0.b32.cont [10/16] 0.0, 128
      %238 = vxpose.xlu0.b32.cont [11/16] 0.0, 128
      %239 = vxpose.xlu0.b32.cont [12/16] 0.0, 128
      %240 = vxpose.xlu0.b32.cont [13/16] 0.0, 128
      %241 = vxpose.xlu0.b32.cont [14/16] 0.0, 128
      %242 = vxpose.xlu0.b32.cont [15/16] 0.0, 128
      %243 = vxpose.xlu0.b32.end [16/16] 0.0, 128
      %v244 = vpop.trf.xlu0
      %v245 = vpop.trf.xlu0
      %v246 = vpop.trf.xlu0
      %v247 = vpop.trf.xlu0
      %v248 = vpop.trf.xlu0
      %v249 = vpop.trf.xlu0
      %v250 = vpop.trf.xlu0
      %v251 = vpop.trf.xlu0
      %v252 = vpop.trf.xlu0
      %v253 = vpop.trf.xlu0
      %v254 = vpop.trf.xlu0
      %v255 = vpop.trf.xlu0
      %v256 = vpop.trf.xlu0
      %v257 = vpop.trf.xlu0
      %v258 = vpop.trf.xlu0
      %v259 = vpop.trf.xlu0
      %260 = vxpose.xlu0.b32.start [1/16] %v192, 128
      %261 = vxpose.xlu0.b32.cont [2/16] %v193, 128
      %262 = vxpose.xlu0.b32.cont [3/16] 0.0, 128
      %263 = vxpose.xlu0.b32.cont [4/16] 0.0, 128
      %264 = vxpose.xlu0.b32.cont [5/16] 0.0, 128
      %265 = vxpose.xlu0.b32.cont [6/16] 0.0, 128
      %266 = vxpose.xlu0.b32.cont [7/16] 0.0, 128
      %267 = vxpose.xlu0.b32.cont [8/16] 0.0, 128
      %268 = vxpose.xlu0.b32.cont [9/16] 0.0, 128
      %269 = vxpose.xlu0.b32.cont [10/16] 0.0, 128
      %270 = vxpose.xlu0.b32.cont [11/16] 0.0, 128
      %271 = vxpose.xlu0.b32.cont [12/16] 0.0, 128
      %272 = vxpose.xlu0.b32.cont [13/16] 0.0, 128
      %273 = vxpose.xlu0.b32.cont [14/16] 0.0, 128
      %274 = vxpose.xlu0.b32.cont [15/16] 0.0, 128
      %275 = vxpose.xlu0.b32.end [16/16] 0.0, 128
      %v276 = vpop.trf.xlu0
      %v277 = vpop.trf.xlu0
      %v278 = vpop.trf.xlu0
      %v279 = vpop.trf.xlu0
      %v280 = vpop.trf.xlu0
      %v281 = vpop.trf.xlu0
      %v282 = vpop.trf.xlu0
      %v283 = vpop.trf.xlu0
      %v284 = vpop.trf.xlu0
      %v285 = vpop.trf.xlu0
      %v286 = vpop.trf.xlu0
      %v287 = vpop.trf.xlu0
      %v288 = vpop.trf.xlu0
      %v289 = vpop.trf.xlu0
      %v290 = vpop.trf.xlu0
      %v291 = vpop.trf.xlu0
      %292 = vxpose.xlu0.b32.start [1/16] %v194, 128
      %293 = vxpose.xlu0.b32.cont [2/16] %v195, 128
      %294 = vxpose.xlu0.b32.cont [3/16] 0.0, 128
      %295 = vxpose.xlu0.b32.cont [4/16] 0.0, 128
      %296 = vxpose.xlu0.b32.cont [5/16] 0.0, 128
      %297 = vxpose.xlu0.b32.cont [6/16] 0.0, 128
      %298 = vxpose.xlu0.b32.cont [7/16] 0.0, 128
      %299 = vxpose.xlu0.b32.cont [8/16] 0.0, 128
      %300 = vxpose.xlu0.b32.cont [9/16] 0.0, 128
      %301 = vxpose.xlu0.b32.cont [10/16] 0.0, 128
      %302 = vxpose.xlu0.b32.cont [11/16] 0.0, 128
      %303 = vxpose.xlu0.b32.cont [12/16] 0.0, 128
      %304 = vxpose.xlu0.b32.cont [13/16] 0.0, 128
      %305 = vxpose.xlu0.b32.cont [14/16] 0.0, 128
      %306 = vxpose.xlu0.b32.cont [15/16] 0.0, 128
      %307 = vxpose.xlu0.b32.end [16/16] 0.0, 128
      %v308 = vpop.trf.xlu0
      %v309 = vpop.trf.xlu0
      %v310 = vpop.trf.xlu0
      %v311 = vpop.trf.xlu0
      %v312 = vpop.trf.xlu0
      %v313 = vpop.trf.xlu0
      %v314 = vpop.trf.xlu0
      %v315 = vpop.trf.xlu0
      %v316 = vpop.trf.xlu0
      %v317 = vpop.trf.xlu0
      %v318 = vpop.trf.xlu0
      %v319 = vpop.trf.xlu0
      %v320 = vpop.trf.xlu0
      %v321 = vpop.trf.xlu0
      %v322 = vpop.trf.xlu0
      %v323 = vpop.trf.xlu0
      %v324 = vld [vmem:[%s1] sm:$0xff]
      %v325 = vld [vmem:[%s1 + $0x8] sm:$0xff]
      %vm326 = vcmask 130048
      %v328 = vsel %vm326, %v212, 0
      %v331 = vsel %vm326, %v244, 0
      %v334 = vsel %vm326, %v276, 0
      %v337 = vsel %vm326, %v308, 0
      %339 = vmatprep.subr.mxu0 0.0
      %340 = vmatpush1.msra.mxu0 %v324
      %341 = vmatprep.subr.mxu0 0.0
      %342 = vmatpush1.msra.mxu0 %v325
      %343 = vmatprep.subr.mxu0 0.0
      %344 = vmatpush1.msra.mxu0 0.0
      %345 = vmatprep.subr.mxu0 0.0
      %346 = vmatpush1.msra.mxu0 0.0
      %347 = vmatprep.subr.mxu0 0.0
      %348 = vmatpush1.msra.mxu0 0.0
      %349 = vmatprep.subr.mxu0 0.0
      %350 = vmatpush1.msra.mxu0 0.0
      %351 = vmatprep.subr.mxu0 0.0
      %352 = vmatpush1.msra.mxu0 0.0
      %353 = vmatprep.subr.mxu0 0.0
      %354 = vmatpush1.msra.mxu0 0.0
      %355 = vmatprep.subr.mxu0 0.0
      %356 = vmatpush1.msra.mxu0 0.0
      %357 = vmatprep.subr.mxu0 0.0
      %358 = vmatpush1.msra.mxu0 0.0
      %359 = vmatprep.subr.mxu0 0.0
      %360 = vmatpush1.msra.mxu0 0.0
      %361 = vmatprep.subr.mxu0 0.0
      %362 = vmatpush1.msra.mxu0 0.0
      %363 = vmatprep.subr.mxu0 0.0
      %364 = vmatpush1.msra.mxu0 0.0
      %365 = vmatprep.subr.mxu0 0.0
      %366 = vmatpush1.msra.mxu0 0.0
      %367 = vmatprep.subr.mxu0 0.0
      %368 = vmatpush1.msra.mxu0 0.0
      %369 = vmatprep.subr.mxu0 0.0
      %370 = vmatpush1.msra.mxu0 0.0
      %371 = vmatprep.subr.mxu0 0.0
      %372 = vmatpush1.msra.mxu0 0.0
      %373 = vmatprep.subr.mxu0 0.0
      %374 = vmatpush1.msra.mxu0 0.0
      %375 = vmatprep.subr.mxu0 0.0
      %376 = vmatpush1.msra.mxu0 0.0
      %377 = vmatprep.subr.mxu0 0.0
      %378 = vmatpush1.msra.mxu0 0.0
      %379 = vmatprep.subr.mxu0 0.0
      %380 = vmatpush1.msra.mxu0 0.0
      %381 = vmatprep.subr.mxu0 0.0
      %382 = vmatpush1.msra.mxu0 0.0
      %383 = vmatprep.subr.mxu0 0.0
      %384 = vmatpush1.msra.mxu0 0.0
      %385 = vmatprep.subr.mxu0 0.0
      %386 = vmatpush1.msra.mxu0 0.0
      %387 = vmatprep.subr.mxu0 0.0
      %388 = vmatpush1.msra.mxu0 0.0
      %389 = vmatprep.subr.mxu0 0.0
      %390 = vmatpush1.msra.mxu0 0.0
      %391 = vmatprep.subr.mxu0 0.0
      %392 = vmatpush1.msra.mxu0 0.0
      %393 = vmatprep.subr.mxu0 0.0
      %394 = vmatpush1.msra.mxu0 0.0
      %395 = vmatprep.subr.mxu0 0.0
      %396 = vmatpush1.msra.mxu0 0.0
      %397 = vmatprep.subr.mxu0 0.0
      %398 = vmatpush1.msra.mxu0 0.0
      %399 = vmatprep.subr.mxu0 0.0
      %400 = vmatpush1.msra.mxu0 0.0
      %401 = vmatprep.subr.mxu0 0.0
      %402 = vmatpush1.msra.mxu0 0.0
      %403 = vmatprep.mubr.f32.mxu0 0.0
      %404 = vmatmul.mubr.f32.gmra.mrb[0].mxu0 %v328
      %v405 = vpop.f32.mrb[0].mxu0
      %v406 = vadd.f32 0.0, %v405
      %v407 = vpop.f32.mrb[0].mxu0
      %408 = vmatprep.mubr.f32.mxu0 0.0
      %409 = vmatmul.mubr.f32.gmra.mrb[0].mxu0 %v331
      %v410 = vpop.f32.mrb[0].mxu0
      %v411 = vadd.f32 0.0, %v410
      %v412 = vpop.f32.mrb[0].mxu0
      %413 = vmatprep.mubr.f32.mxu0 0.0
      %414 = vmatmul.mubr.f32.gmra.mrb[0].mxu0 %v334
      %v415 = vpop.f32.mrb[0].mxu0
      %v416 = vadd.f32 0.0, %v415
      %v417 = vpop.f32.mrb[0].mxu0
      %418 = vmatprep.mubr.f32.mxu0 0.0
      %419 = vmatmul.mubr.f32.gmra.mrb[0].mxu0 %v337
      %v420 = vpop.f32.mrb[0].mxu0
      %v421 = vadd.f32 0.0, %v420
      %v422 = vpop.f32.mrb[0].mxu0
      %423 = vdwg.mxu0
      %424 = vxpose.xlu0.b32.start [1/16] %v406, 128
      %425 = vxpose.xlu0.b32.cont [2/16] 0.0, 128
      %426 = vxpose.xlu0.b32.cont [3/16] 0.0, 128
      %427 = vxpose.xlu0.b32.cont [4/16] 0.0, 128
      %428 = vxpose.xlu0.b32.cont [5/16] 0.0, 128
      %429 = vxpose.xlu0.b32.cont [6/16] 0.0, 128
      %430 = vxpose.xlu0.b32.cont [7/16] 0.0, 128
      %431 = vxpose.xlu0.b32.cont [8/16] 0.0, 128
      %432 = vxpose.xlu0.b32.cont [9/16] 0.0, 128
      %433 = vxpose.xlu0.b32.cont [10/16] 0.0, 128
      %434 = vxpose.xlu0.b32.cont [11/16] 0.0, 128
      %435 = vxpose.xlu0.b32.cont [12/16] 0.0, 128
      %436 = vxpose.xlu0.b32.cont [13/16] 0.0, 128
      %437 = vxpose.xlu0.b32.cont [14/16] 0.0, 128
      %438 = vxpose.xlu0.b32.cont [15/16] 0.0, 128
      %439 = vxpose.xlu0.b32.end [16/16] 0.0, 128
      %v440 = vpop.trf.xlu0
      %v441 = vpop.trf.xlu0
      %v442 = vpop.trf.xlu0
      %v443 = vpop.trf.xlu0
      %v444 = vpop.trf.xlu0
      %v445 = vpop.trf.xlu0
      %v446 = vpop.trf.xlu0
      %v447 = vpop.trf.xlu0
      %v448 = vpop.trf.xlu0
      %v449 = vpop.trf.xlu0
      %v450 = vpop.trf.xlu0
      %v451 = vpop.trf.xlu0
      %v452 = vpop.trf.xlu0
      %v453 = vpop.trf.xlu0
      %v454 = vpop.trf.xlu0
      %v455 = vpop.trf.xlu0
      %456 = vxpose.xlu0.b32.start [1/16] %v411, 128
      %457 = vxpose.xlu0.b32.cont [2/16] 0.0, 128
      %458 = vxpose.xlu0.b32.cont [3/16] 0.0, 128
      %459 = vxpose.xlu0.b32.cont [4/16] 0.0, 128
      %460 = vxpose.xlu0.b32.cont [5/16] 0.0, 128
      %461 = vxpose.xlu0.b32.cont [6/16] 0.0, 128
      %462 = vxpose.xlu0.b32.cont [7/16] 0.0, 128
      %463 = vxpose.xlu0.b32.cont [8/16] 0.0, 128
      %464 = vxpose.xlu0.b32.cont [9/16] 0.0, 128
      %465 = vxpose.xlu0.b32.cont [10/16] 0.0, 128
      %466 = vxpose.xlu0.b32.cont [11/16] 0.0, 128
      %467 = vxpose.xlu0.b32.cont [12/16] 0.0, 128
      %468 = vxpose.xlu0.b32.cont [13/16] 0.0, 128
      %469 = vxpose.xlu0.b32.cont [14/16] 0.0, 128
      %470 = vxpose.xlu0.b32.cont [15/16] 0.0, 128
      %471 = vxpose.xlu0.b32.end [16/16] 0.0, 128
      %v472 = vpop.trf.xlu0
      %v473 = vpop.trf.xlu0
      %v474 = vpop.trf.xlu0
      %v475 = vpop.trf.xlu0
      %v476 = vpop.trf.xlu0
      %v477 = vpop.trf.xlu0
      %v478 = vpop.trf.xlu0
      %v479 = vpop.trf.xlu0
      %v480 = vpop.trf.xlu0
      %v481 = vpop.trf.xlu0
      %v482 = vpop.trf.xlu0
      %v483 = vpop.trf.xlu0
      %v484 = vpop.trf.xlu0
      %v485 = vpop.trf.xlu0
      %v486 = vpop.trf.xlu0
      %v487 = vpop.trf.xlu0
      %488 = vxpose.xlu0.b32.start [1/16] %v416, 128
      %489 = vxpose.xlu0.b32.cont [2/16] 0.0, 128
      %490 = vxpose.xlu0.b32.cont [3/16] 0.0, 128
      %491 = vxpose.xlu0.b32.cont [4/16] 0.0, 128
      %492 = vxpose.xlu0.b32.cont [5/16] 0.0, 128
      %493 = vxpose.xlu0.b32.cont [6/16] 0.0, 128
      %494 = vxpose.xlu0.b32.cont [7/16] 0.0, 128
      %495 = vxpose.xlu0.b32.cont [8/16] 0.0, 128
      %496 = vxpose.xlu0.b32.cont [9/16] 0.0, 128
      %497 = vxpose.xlu0.b32.cont [10/16] 0.0, 128
      %498 = vxpose.xlu0.b32.cont [11/16] 0.0, 128
      %499 = vxpose.xlu0.b32.cont [12/16] 0.0, 128
      %500 = vxpose.xlu0.b32.cont [13/16] 0.0, 128
      %501 = vxpose.xlu0.b32.cont [14/16] 0.0, 128
      %502 = vxpose.xlu0.b32.cont [15/16] 0.0, 128
      %503 = vxpose.xlu0.b32.end [16/16] 0.0, 128
      %v504 = vpop.trf.xlu0
      %v505 = vpop.trf.xlu0
      %v506 = vpop.trf.xlu0
      %v507 = vpop.trf.xlu0
      %v508 = vpop.trf.xlu0
      %v509 = vpop.trf.xlu0
      %v510 = vpop.trf.xlu0
      %v511 = vpop.trf.xlu0
      %v512 = vpop.trf.xlu0
      %v513 = vpop.trf.xlu0
      %v514 = vpop.trf.xlu0
      %v515 = vpop.trf.xlu0
      %v516 = vpop.trf.xlu0
      %v517 = vpop.trf.xlu0
      %v518 = vpop.trf.xlu0
      %v519 = vpop.trf.xlu0
      %520 = vxpose.xlu0.b32.start [1/16] %v421, 128
      %521 = vxpose.xlu0.b32.cont [2/16] 0.0, 128
      %522 = vxpose.xlu0.b32.cont [3/16] 0.0, 128
      %523 = vxpose.xlu0.b32.cont [4/16] 0.0, 128
      %524 = vxpose.xlu0.b32.cont [5/16] 0.0, 128
      %525 = vxpose.xlu0.b32.cont [6/16] 0.0, 128
      %526 = vxpose.xlu0.b32.cont [7/16] 0.0, 128
      %527 = vxpose.xlu0.b32.cont [8/16] 0.0, 128
      %528 = vxpose.xlu0.b32.cont [9/16] 0.0, 128
      %529 = vxpose.xlu0.b32.cont [10/16] 0.0, 128
      %530 = vxpose.xlu0.b32.cont [11/16] 0.0, 128
      %531 = vxpose.xlu0.b32.cont [12/16] 0.0, 128
      %532 = vxpose.xlu0.b32.cont [13/16] 0.0, 128
      %533 = vxpose.xlu0.b32.cont [14/16] 0.0, 128
      %534 = vxpose.xlu0.b32.cont [15/16] 0.0, 128
      %535 = vxpose.xlu0.b32.end [16/16] 0.0, 128
      %v536 = vpop.trf.xlu0
      %v537 = vpop.trf.xlu0
      %v538 = vpop.trf.xlu0
      %v539 = vpop.trf.xlu0
      %v540 = vpop.trf.xlu0
      %v541 = vpop.trf.xlu0
      %v542 = vpop.trf.xlu0
      %v543 = vpop.trf.xlu0
      %v544 = vpop.trf.xlu0
      %v545 = vpop.trf.xlu0
      %v546 = vpop.trf.xlu0
      %v547 = vpop.trf.xlu0
      %v548 = vpop.trf.xlu0
      %v549 = vpop.trf.xlu0
      %v550 = vpop.trf.xlu0
      %v551 = vpop.trf.xlu0
      %vm552 = vcmask 64512
      %553 = vst.msk [vmem:[%s186] sm:$0xff] %vm552, %v440
      %554 = vst.msk [vmem:[%s186 + $0x8] sm:$0xff] %vm552, %v441
      %555 = vst.msk [vmem:[%s186 + $0x10] sm:$0xff] %vm552, %v472
      %556 = vst.msk [vmem:[%s186 + $0x18] sm:$0xff] %vm552, %v473
      %557 = vst.msk [vmem:[%s186 + $0x20] sm:$0xff] %vm552, %v504
      %558 = vst.msk [vmem:[%s186 + $0x28] sm:$0xff] %vm552, %v505
      %559 = vst.msk [vmem:[%s186 + $0x30] sm:$0xff] %vm552, %v536
      %560 = vst.msk [vmem:[%s186 + $0x38] sm:$0xff] %vm552, %v537
      %s561 = smul.u32 4, %s18
      %p562 = scmp.lt.s32.totalorder %s17, 1
      %s563 = scalar_select %p562, %s17, 1
      %p564 = scmp.lt.s32.totalorder %s561, 3
      %s565 = scalar_select %p564, %s561, 3
      %s566 = smul.addr %s565, 2
      %s567 = smul.addr %s563, 8
      %s568 = sadd.s32 %s566, %s567
      %s569 = smul.addr %s568, 8
      %s570 = scalar_lea.vmem %s2, %s569
      // Predicated region
      $region29: #{tpu_custom_call.1} parent=27 // pred_check
        %p571 = pneg %p94
      $region30: #{tpu_custom_call.1} parent=27 // pred_check_branch
        %573 = sbr.rel (%p571) target = $region32
      $region31: #{tpu_custom_call.1} parent=27 // pred_region
        %s574 = smul.u32 4, %s18
      $region32: #{tpu_custom_call.1} parent=27 // pred_fallthru
        _
    $region28: #{tpu_custom_call.1} parent=5 // pred_fallthru
      _
    %p575 = scmp.le.s32.totalorder 2, %s8
    // Predicated region
    $region33: #{tpu_custom_call.1} parent=5 // pred_check
      %p576 = pneg %p575
    $region34: #{tpu_custom_call.1} parent=5 // pred_check_branch
      %578 = sbr.rel (%p576) target = $region36
    $region35: #{tpu_custom_call.1} parent=5 // pred_region
      %s579 = ssub.s32 %s8, 2
      // Predicated region
      $region37: #{tpu_custom_call.1} parent=35 // pred_check
        %p580 = pneg %p100
      $region38: #{tpu_custom_call.1} parent=35 // pred_check_branch
        %582 = sbr.rel (%p580) target = $region40
      $region39: #{tpu_custom_call.1} parent=35 // pred_region
        %s583 = smul.u32 4, %s20
        %p584 = scmp.lt.s32.totalorder %s19, 1
        %s585 = scalar_select %p584, %s19, 1
        %p586 = scmp.lt.s32.totalorder %s583, 3
        %s587 = scalar_select %p586, %s583, 3
        %s588 = smul.addr %s587, 2
        %s589 = smul.addr %s585, 8
        %s590 = sadd.s32 %s588, %s589
        %s591 = smul.addr %s590, 8
        %s592 = scalar_lea.vmem %s2, %s591
      $region40: #{tpu_custom_call.1} parent=35 // pred_fallthru
        _
    $region36: #{tpu_custom_call.1} parent=5 // pred_fallthru
      _
  $region6: #{tpu_custom_call.1} parent=0 // loop_footer
    %s12 = sadd.s32 1, %s8
  $region7: #{tpu_custom_call.1} parent=0 // loop_footer_branch
    %7 = sbr.rel target = $region3
  $region8: #{tpu_custom_call.1} parent=0 // loop_exit
    _

</llo_original>
